<compile_context>
chip_gen: v5e
topology: v5e:2x2
jax: 0.10.0
libtpu: 0.0.40
codegen_flags: <defaults>
</compile_context>

<pallas_src>
import math
import numpy as np
import jax
import jax.numpy as jnp
from jax.experimental import pallas as pl
from jax.experimental.pallas import tpu as pltpu


# ----------------------------- host-side constant builders -----------------------------

def _get_freq_indices(method):
    """Replicates get_freq_indices()."""
    assert method in ['top1', 'top2', 'top4', 'top8', 'top16', 'top32',
                      'bot1', 'bot2', 'bot4', 'bot8', 'bot16', 'bot32',
                      'low1', 'low2', 'low4', 'low8', 'low16', 'low32']
    num_freq = int(method[3:])
    if 'top' in method:
        all_top = [0, 1, 2, 4, 8, 10, 12, 14, 18, 24, 28, 32, 40, 48, 50, 60]
        all_top = [int(v / 32) for v in all_top]
        return all_top[:num_freq]
    elif 'low' in method:
        all_low = [0, 0, 1, 1, 0, 2, 2, 1, 2, 0, 3, 4, 0, 1, 3, 0,
                   1, 2, 3, 4, 5, 0, 1, 2, 3, 4, 5, 6, 1, 2, 3, 4]
        return all_low[:num_freq]
    else:
        all_bot = [6, 1, 3, 3, 2, 4, 1, 2, 4, 4, 5, 1, 4, 6, 2, 5,
                   6, 1, 6, 2, 2, 4, 3, 3, 5, 5, 6, 2, 5, 5, 3, 6]
        return all_bot[:num_freq]


def _dct_filter(length, mapper_x, channel):
    """Replicates MultiSpectralDCTLayer.get_dct_filter -> (channel, length) float32."""
    assert channel % len(mapper_x) == 0
    c_part = channel // len(mapper_x)
    t = np.arange(length, dtype=np.float64)
    filt = np.zeros((channel, length), dtype=np.float32)
    for i, u in enumerate(mapper_x):
        row = np.cos(np.pi * u * (t + 0.5) / length) / math.sqrt(length)
        if u != 0:
            row = row * math.sqrt(2.0)
        filt[i * c_part:(i + 1) * c_part, :] = row.astype(np.float32)
    return filt


def _adaptive_avg_pool_matrix(l_in, l_out):
    """torch.nn.functional.adaptive_avg_pool1d(x, l_out) as an (l_in, l_out) matrix."""
    m = np.zeros((l_in, l_out), dtype=np.float32)
    for j in range(l_out):
        start = (j * l_in) // l_out
        end = -((-(j + 1) * l_in) // l_out)          # ceil((j+1)*l_in/l_out)
        m[start:end, j] = 1.0 / float(end - start)
    return m


# ------------------------------------ Pallas kernel -------------------------------------

def _msal_kernel(x_ref, wdct_ref, w1t_ref, w2t_ref, out_ref):
    # x_ref / out_ref: (B_TILE, C, L)   wdct: (C, L) f32   w1t: (C, H) f32   w2t: (H, C) f32
    xb = x_ref[...]                                   # whole block, native I/O dtype
    w = wdct_ref[...]                                 # (C, L)  DCT filter (already f32)

    # MultiSpectralDCTLayer: per-channel DCT weighting + reduction over length (lane reduce).
    y = jnp.sum(xb.astype(jnp.float32) * w[None], axis=-1)                 # (B_TILE, C) f32

    # fc: Linear(C,H,bias=False) -> ReLU -> Linear(H,C,bias=False) -> Sigmoid, batched over
    # the block as two small matmuls (weights pre-transposed in the wrapper).
    h = jnp.maximum(jnp.dot(y, w1t_ref[...], preferred_element_type=jnp.float32), 0.0)   # (B_TILE, H)
    g = jax.nn.sigmoid(jnp.dot(h, w2t_ref[...], preferred_element_type=jnp.float32))     # (B_TILE, C)

    # x * y.expand_as(x): per-channel gate broadcast along the (lane) length axis.
    # Gate in the I/O dtype (bf16 stays bf16 on v6e/v7x; exact for f32 inputs).
    out_ref[...] = (xb * g[:, :, None].astype(xb.dtype)).astype(out_ref.dtype)


# -------------------------------------- wrapper ----------------------------------------

def multi_spectral_attention_1d(x, dct_weight, fc1_weight, fc2_weight, *, b_tile=None):
    """x: (B, C, L_in).  dct_weight: (C, length).  fc1_weight: (H, C).  fc2_weight: (C, H)."""
    B, C, L_in = x.shape
    length = dct_weight.shape[1]
    out_dtype = x.dtype

    if L_in != length:
        # Rare resize branch: F.adaptive_avg_pool1d(x, length) as an exact precomputed
        # averaging matrix (XLA glue outside the kernel).
        pool = jnp.asarray(_adaptive_avg_pool_matrix(L_in, length))
        x = jnp.einsum('bcl,lm->bcm', x, pool).astype(out_dtype)
    L = length

    H = fc1_weight.shape[0]
    assert dct_weight.shape == (C, L)
    assert fc1_weight.shape == (H, C) and fc2_weight.shape == (C, H)

    plane_bytes = C * L * x.dtype.itemsize
    if b_tile is None:
        # HBM-roofline sizing: target ~2 MiB of x per block, but keep >= 2 grid steps so
        # v7x's two TensorCores both get work under dimension_semantics=("parallel",).
        b_tile = max(1, (2 << 20) // max(1, plane_bytes))
        if B >= 2:
            b_tile = min(b_tile, pl.cdiv(B, 2))
    b_tile = int(max(1, min(int(b_tile), B)))
    grid = (pl.cdiv(B, b_tile),)

    # Explicit VMEM budget: constants + double-buffered x/out blocks + headroom,
    # derived from the device cap (v7x has only 64 MiB physical VMEM).
    try:
        vmem_cap = int(pltpu.get_tpu_info().vmem_capacity_bytes)
    except Exception:  # pragma: no cover - conservative fallback (v7x-sized)
        vmem_cap = 64 << 20
    const_bytes = 4 * (C * L + 2 * H * C)
    block_bytes = b_tile * C * L * x.dtype.itemsize
    want = 2 * const_bytes + 4 * block_bytes + (4 << 20)     # 2x buffered x + out blocks
    vmem_limit = int(min(max(want, 16 << 20), 32 << 20, max(vmem_cap // 2, 16 << 20)))

    out = pl.pallas_call(
        _msal_kernel,
        out_shape=jax.ShapeDtypeStruct((B, C, L), out_dtype),
        grid=grid,
        in_specs=[
            pl.BlockSpec((b_tile, C, L), lambda i: (i, 0, 0)),   # x batch tile
            pl.BlockSpec((C, L), lambda i: (0, 0)),              # DCT filter (constant)
            pl.BlockSpec((C, H), lambda i: (0, 0)),              # fc1 weight, pre-transposed
            pl.BlockSpec((H, C), lambda i: (0, 0)),              # fc2 weight, pre-transposed
        ],
        out_specs=pl.BlockSpec((b_tile, C, L), lambda i: (i, 0, 0)),
        compiler_params=pltpu.CompilerParams(
            dimension_semantics=("parallel",),       # independent batch tiles (v7x dual-TC)
            vmem_limit_bytes=vmem_limit,
        ),
    )(x,
      dct_weight.astype(jnp.float32),
      jnp.transpose(fc1_weight).astype(jnp.float32),   # (C, H)
      jnp.transpose(fc2_weight).astype(jnp.float32))   # (H, C)
    return out


# ---------------------------------------- demo ------------------------------------------

if __name__ == "__main__":
    key = jax.random.PRNGKey(0)
    k1, k2, k3 = jax.random.split(key, 3)

    # MultiSpectralAttentionLayer1D(channel=32, length=128, reduction=16, 'top16')
    B, C, L = 4, 32, 128
    reduction, freq_sel = 16, 'top16'
    H = C // reduction

    mapper_x = [m * math.floor(L / 62) for m in _get_freq_indices(freq_sel)]
    dct_weight = jnp.asarray(_dct_filter(L, mapper_x, C))                     # (C, L) buffer

    # TODO(synk): torch Linear kaiming-uniform init replaced by deterministic uniform(+-1/sqrt(fan_in)).
    fc1_weight = (jax.random.uniform(k1, (H, C), jnp.float32) * 2.0 - 1.0) / math.sqrt(C)
    fc2_weight = (jax.random.uniform(k2, (C, H), jnp.float32) * 2.0 - 1.0) / math.sqrt(H)

    x = jax.random.normal(k3, (B, C, L), jnp.float32)

    out = multi_spectral_attention_1d(x, dct_weight, fc1_weight, fc2_weight)
    jax.block_until_ready(out)
    assert out.shape == (B, C, L) and out.dtype == x.dtype

    # Pure-JAX reference check of the forward pass.
    y_ref = jnp.sum(x * dct_weight[None], axis=-1)                            # (B, C)
    g_ref = jax.nn.sigmoid(jnp.maximum(y_ref @ fc1_weight.T, 0.0) @ fc2_weight.T)
    out_ref = x * g_ref[:, :, None]
    np.testing.assert_allclose(np.asarray(out), np.asarray(out_ref), rtol=1e-3, atol=1e-3)

    print("KERNEL_OK")
</pallas_src>

<mosaic_0001>
module attributes {stable_mosaic.version = 11 : i64} {
  func.func @_msal_kernel(%arg0: i32, %arg1: memref<2x32x128xf32, #tpu.memory_space<vmem>>, %arg2: memref<32x128xf32, #tpu.memory_space<vmem>>, %arg3: memref<32x2xf32, #tpu.memory_space<vmem>>, %arg4: memref<2x32xf32, #tpu.memory_space<vmem>>, %arg5: memref<2x32x128xf32, #tpu.memory_space<vmem>>) attributes {dimension_semantics = [#tpu.dimension_semantics<parallel>], iteration_bounds = array<i64: 2>, scalar_prefetch = 0 : i64, scratch_operands = 0 : i64, tpu.core_type = #tpu.core_type<tc>, window_params = [{transform_indices = @transform_0, window_bounds = array<i64: 2, 32, 128>}, {pipeline_mode = #tpu.pipeline_mode<synchronous>, transform_indices = @transform_1, window_bounds = array<i64: 32, 128>}, {pipeline_mode = #tpu.pipeline_mode<synchronous>, transform_indices = @transform_2, window_bounds = array<i64: 32, 2>}, {pipeline_mode = #tpu.pipeline_mode<synchronous>, transform_indices = @transform_3, window_bounds = array<i64: 2, 32>}, {transform_indices = @transform_4, window_bounds = array<i64: 2, 32, 128>}]} {
    %c0 = arith.constant 0 : index
    %c0_0 = arith.constant 0 : index
    %c0_1 = arith.constant 0 : index
    %0 = vector.load %arg1[%c0, %c0_0, %c0_1] : memref<2x32x128xf32, #tpu.memory_space<vmem>>, vector<2x32x128xf32>
    %c0_2 = arith.constant 0 : index
    %c0_3 = arith.constant 0 : index
    %1 = vector.load %arg2[%c0_2, %c0_3] : memref<32x128xf32, #tpu.memory_space<vmem>>, vector<32x128xf32>
    %2 = vector.shape_cast %1 : vector<32x128xf32> to vector<1x32x128xf32>
    %3 = vector.broadcast %2 : vector<1x32x128xf32> to vector<2x32x128xf32>
    %4 = arith.mulf %0, %3 : vector<2x32x128xf32>
    %cst = arith.constant dense<0.000000e+00> : vector<2x32xf32>
    %5 = vector.multi_reduction <add>, %4, %cst [2] : vector<2x32x128xf32> to vector<2x32xf32>
    %c0_4 = arith.constant 0 : index
    %c0_5 = arith.constant 0 : index
    %6 = vector.load %arg3[%c0_4, %c0_5] : memref<32x2xf32, #tpu.memory_space<vmem>>, vector<32x2xf32>
    %cst_6 = arith.constant dense<0.000000e+00> : vector<2x2xf32>
    %7 = tpu.matmul %5, %6, %cst_6 {dimension_numbers = #tpu.dot_dimension_numbers<[1], [0], [0], [1], [0, 0, 1, 1], [], []>} : vector<2x32xf32>, vector<32x2xf32>, vector<2x2xf32> -> vector<2x2xf32>
    %cst_7 = arith.constant 0.000000e+00 : f32
    %8 = vector.broadcast %cst_7 : f32 to vector<2x2xf32>
    %9 = arith.maximumf %7, %8 : vector<2x2xf32>
    %c0_8 = arith.constant 0 : index
    %c0_9 = arith.constant 0 : index
    %10 = vector.load %arg4[%c0_8, %c0_9] : memref<2x32xf32, #tpu.memory_space<vmem>>, vector<2x32xf32>
    %cst_10 = arith.constant dense<0.000000e+00> : vector<2x32xf32>
    %11 = tpu.matmul %9, %10, %cst_10 {dimension_numbers = #tpu.dot_dimension_numbers<[1], [0], [0], [1], [0, 0, 1, 1], [], []>} : vector<2x2xf32>, vector<2x32xf32>, vector<2x32xf32> -> vector<2x32xf32>
    %12 = arith.negf %11 : vector<2x32xf32>
    %13 = math.exp %12 : vector<2x32xf32>
    %cst_11 = arith.constant 1.000000e+00 : f32
    %14 = vector.broadcast %cst_11 : f32 to vector<2x32xf32>
    %15 = arith.addf %14, %13 : vector<2x32xf32>
    %16 = arith.divf %14, %15 : vector<2x32xf32>
    %17 = vector.shape_cast %16 : vector<2x32xf32> to vector<2x32x1xf32>
    %18 = vector.broadcast %17 : vector<2x32x1xf32> to vector<2x32x128xf32>
    %19 = arith.mulf %0, %18 : vector<2x32x128xf32>
    %c0_12 = arith.constant 0 : index
    %c0_13 = arith.constant 0 : index
    %c0_14 = arith.constant 0 : index
    %20 = vector.load %arg5[%c0_12, %c0_13, %c0_14] : memref<2x32x128xf32, #tpu.memory_space<vmem>>, vector<2x32x128xf32>
    tpu.vector_store %arg5[%c0_12, %c0_13, %c0_14], %19 {strides = array<i32>} : memref<2x32x128xf32, #tpu.memory_space<vmem>>, vector<2x32x128xf32>,
    return
  }
  func.func @transform_0(%arg0: i32) -> (i32, i32, i32) {
    %c0_i32 = arith.constant 0 : i32
    %c0_i32_0 = arith.constant 0 : i32
    %c0_i32_1 = arith.constant 0 : i32
    return %arg0, %c0_i32, %c0_i32_0 : i32, i32, i32
  }
  func.func @transform_1(%arg0: i32) -> (i32, i32) {
    %c0_i32 = arith.constant 0 : i32
    %c0_i32_0 = arith.constant 0 : i32
    %c0_i32_1 = arith.constant 0 : i32
    return %c0_i32, %c0_i32_0 : i32, i32
  }
  func.func @transform_2(%arg0: i32) -> (i32, i32) {
    %c0_i32 = arith.constant 0 : i32
    %c0_i32_0 = arith.constant 0 : i32
    %c0_i32_1 = arith.constant 0 : i32
    return %c0_i32, %c0_i32_0 : i32, i32
  }
  func.func @transform_3(%arg0: i32) -> (i32, i32) {
    %c0_i32 = arith.constant 0 : i32
    %c0_i32_0 = arith.constant 0 : i32
    %c0_i32_1 = arith.constant 0 : i32
    return %c0_i32, %c0_i32_0 : i32, i32
  }
  func.func @transform_4(%arg0: i32) -> (i32, i32, i32) {
    %c0_i32 = arith.constant 0 : i32
    %c0_i32_0 = arith.constant 0 : i32
    %c0_i32_1 = arith.constant 0 : i32
    return %arg0, %c0_i32, %c0_i32_0 : i32, i32, i32
  }
}

</mosaic_0001>

<llo_original>
// kernel: tpu_custom_call.1
$region0: #{tpu_custom_call.1}
  #allocation0 [shape = 'u32[]', space=smem, size = 0x4, offset = 0x4, fixed_abs, tag = 'smem constant byte address 0x4 - core index']
  #allocation1 [shape = 'u32[72,128]{1,0:T(1,128)}', space=vmem, size = 0x9000, scoped, tag = 'internal scratch']
  %s0 = inlined_call_operand.hbm [shape: f32[4,32,128], index: 0, kind: input, shape index: {}]
  %s1 = inlined_call_operand.vmem [shape: f32[32,128], index: 1, kind: input, shape index: {}]
  %s2 = inlined_call_operand.vmem [shape: f32[32,2], index: 2, kind: input, shape index: {}]
  %s3 = inlined_call_operand.vmem [shape: f32[2,32], index: 3, kind: input, shape index: {}]
  %s4 = inlined_call_operand.hbm [shape: f32[4,32,128], index: 4, kind: output, shape index: {}]
  %s5 = sld [smem:[#allocation0]]
  $region53: #{tpu_custom_call.1} parent=0
    _
  %s7 = ssub.s32 1, %s5
  %s8 = scalar_select 0, %s7, %s5
  $region1: #{tpu_custom_call.1} parent=0
    #allocation2 [shape = 'u8[65536]{0}', space=vmem, size = 0x10000, scoped, tag = 'input window, operand 0']
    #allocation3 [shape = 's32[2]{0}', space=sflag, size = 0x8, scoped, tag = 'scoped memory for tpu_custom_call.1']
    #allocation4 [shape = 's32[2]{0}', space=sflag, size = 0x8, scoped, tag = 'scoped memory for tpu_custom_call.1']
    #allocation5 [shape = 'u8[65536]{0}', space=vmem, size = 0x10000, scoped, tag = 'output window, operand 0']
    %9 = vsyncpa [#allocation3], 0
    %s10 = scalar_lea.sflag [#allocation3], 1
    %11 = vsyncpa %s10, 0
    %12 = vsyncpa [#allocation4], 0
    %s13 = scalar_lea.sflag [#allocation4], 1
    %14 = vsyncpa %s13, 0
    loop: start=0, step=1, limit=4
    $region2: #{tpu_custom_call.1} parent=1 // loop_pre_header
      _
    $region3: #{tpu_custom_call.1} parent=1 // loop_header
      %s16 = sphi 0, %s20
      %p17 = scmp.ge.s32.totalorder %s16, 4
      %s26 = sphi 0, %s28
      %s29 = sphi 0, %s26
      %s30 = sphi 0, %s29
      %s46 = sphi 0, %s30
      %s50 = sphi 0, %s50
      %s52 = sphi 0, %s50
      %s53 = sphi 0, %s52
      %s67 = sphi 0, %s53
      %s71 = sphi 0, %s71
      %s73 = sphi 0, %s71
      %s74 = sphi 0, %s73
      %s88 = sphi 0, %s74
      %s92 = sphi 0, %s92
      %s94 = sphi 0, %s92
      %s95 = sphi 0, %s94
      %s109 = sphi 0, %s95
      %s115 = sphi 0, %s117
      %s118 = sphi 0, %s115
      %s119 = sphi 0, %s118
      %s135 = sphi 0, %s119
    $region4: #{tpu_custom_call.1} parent=1 // loop_header_branch
      %19 = sbr.rel (%p17) target = $region8
    $region5: #{tpu_custom_call.1} parent=1 // loop_body
      %s21 = ssub.s32 %s16, 1
      %s22 = ssub.s32 %s16, 2
      %s23 = sadd.s32 %s16, 1
      %s24 = ssub.s32 %s16, %s23
      %p25 = scmp.eq.s32.totalorder %s24, 0
      %s27 = sadd.s32 %s26, 1
      %s28 = scalar_select %p25, %s26, %s27
      %p31 = pneg %p25
      %p32 = scmp.eq.s32.totalorder %s16, 1
      %p33 = por %p31, %p32
      %p34 = scmp.ne.s32.totalorder %s26, %s29
      %p35 = scmp.eq.s32.totalorder %s16, 0
      %p36 = por %p34, %p35
      %p37 = scmp.ne.s32.totalorder %s26, %s29
      %p38 = scmp.eq.s32.totalorder %s21, 1
      %p39 = por %p37, %p38
      %p40 = scmp.ne.s32.totalorder %s29, %s30
      %p41 = scmp.eq.s32.totalorder %s21, 0
      %p42 = por %p40, %p41
      %p43 = scmp.ne.s32.totalorder %s29, %s30
      %p44 = scmp.eq.s32.totalorder %s22, 1
      %p45 = por %p43, %p44
      %p47 = scmp.ne.s32.totalorder %s30, %s46
      %p48 = scmp.eq.s32.totalorder %s22, 0
      %p49 = por %p47, %p48
      %s51 = sadd.s32 %s50, 1
      %p54 = scmp.eq.s32.totalorder %s16, 1
      %p55 = scmp.ne.s32.totalorder %s50, %s52
      %p56 = scmp.eq.s32.totalorder %s16, 0
      %p57 = por %p55, %p56
      %p58 = scmp.ne.s32.totalorder %s50, %s52
      %p59 = scmp.eq.s32.totalorder %s21, 1
      %p60 = por %p58, %p59
      %p61 = scmp.ne.s32.totalorder %s52, %s53
      %p62 = scmp.eq.s32.totalorder %s21, 0
      %p63 = por %p61, %p62
      %p64 = scmp.ne.s32.totalorder %s52, %s53
      %p65 = scmp.eq.s32.totalorder %s22, 1
      %p66 = por %p64, %p65
      %p68 = scmp.ne.s32.totalorder %s53, %s67
      %p69 = scmp.eq.s32.totalorder %s22, 0
      %p70 = por %p68, %p69
      %s72 = sadd.s32 %s71, 1
      %p75 = scmp.eq.s32.totalorder %s16, 1
      %p76 = scmp.ne.s32.totalorder %s71, %s73
      %p77 = scmp.eq.s32.totalorder %s16, 0
      %p78 = por %p76, %p77
      %p79 = scmp.ne.s32.totalorder %s71, %s73
      %p80 = scmp.eq.s32.totalorder %s21, 1
      %p81 = por %p79, %p80
      %p82 = scmp.ne.s32.totalorder %s73, %s74
      %p83 = scmp.eq.s32.totalorder %s21, 0
      %p84 = por %p82, %p83
      %p85 = scmp.ne.s32.totalorder %s73, %s74
      %p86 = scmp.eq.s32.totalorder %s22, 1
      %p87 = por %p85, %p86
      %p89 = scmp.ne.s32.totalorder %s74, %s88
      %p90 = scmp.eq.s32.totalorder %s22, 0
      %p91 = por %p89, %p90
      %s93 = sadd.s32 %s92, 1
      %p96 = scmp.eq.s32.totalorder %s16, 1
      %p97 = scmp.ne.s32.totalorder %s92, %s94
      %p98 = scmp.eq.s32.totalorder %s16, 0
      %p99 = por %p97, %p98
      %p100 = scmp.ne.s32.totalorder %s92, %s94
      %p101 = scmp.eq.s32.totalorder %s21, 1
      %p102 = por %p100, %p101
      %p103 = scmp.ne.s32.totalorder %s94, %s95
      %p104 = scmp.eq.s32.totalorder %s21, 0
      %p105 = por %p103, %p104
      %p106 = scmp.ne.s32.totalorder %s94, %s95
      %p107 = scmp.eq.s32.totalorder %s22, 1
      %p108 = por %p106, %p107
      %p110 = scmp.ne.s32.totalorder %s95, %s109
      %p111 = scmp.eq.s32.totalorder %s22, 0
      %p112 = por %p110, %p111
      %s113 = ssub.s32 %s16, %s23
      %p114 = scmp.eq.s32.totalorder %s113, 0
      %s116 = sadd.s32 %s115, 1
      %s117 = scalar_select %p114, %s115, %s116
      %p120 = pneg %p114
      %p121 = scmp.eq.s32.totalorder %s16, 1
      %p122 = por %p120, %p121
      %p123 = scmp.ne.s32.totalorder %s115, %s118
      %p124 = scmp.eq.s32.totalorder %s16, 0
      %p125 = por %p123, %p124
      %p126 = scmp.ne.s32.totalorder %s115, %s118
      %p127 = scmp.eq.s32.totalorder %s21, 1
      %p128 = por %p126, %p127
      %p129 = scmp.ne.s32.totalorder %s118, %s119
      %p130 = scmp.eq.s32.totalorder %s21, 0
      %p131 = por %p129, %p130
      %p132 = scmp.ne.s32.totalorder %s118, %s119
      %p133 = scmp.eq.s32.totalorder %s22, 1
      %p134 = por %p132, %p133
      %p136 = scmp.ne.s32.totalorder %s119, %s135
      %p137 = scmp.eq.s32.totalorder %s22, 0
      %p138 = por %p136, %p137
      %p139 = scmp.le.s32.totalorder 1, %s16
      %p140 = scmp.lt.s32.totalorder %s16, 3
      %p141 = pnand %p139, %p140
      %p142 = pneg %p141
      // Predicated region
      $region9: #{tpu_custom_call.1} parent=5 // pred_check
        _
      $region10: #{tpu_custom_call.1} parent=5 // pred_check_branch
        %144 = sbr.rel (%p141) target = $region12
      $region11: #{tpu_custom_call.1} parent=5 // pred_region
        %s145 = ssub.s32 %s16, 1
        // Predicated region
        $region13: #{tpu_custom_call.1} parent=11 // pred_check
          %p146 = pneg %p63
        $region14: #{tpu_custom_call.1} parent=11 // pred_check_branch
          %148 = sbr.rel (%p146) target = $region16
        $region15: #{tpu_custom_call.1} parent=11 // pred_region
          _
        $region16: #{tpu_custom_call.1} parent=11 // pred_fallthru
          _
        // Predicated region
        $region17: #{tpu_custom_call.1} parent=11 // pred_check
          %p149 = pneg %p84
        $region18: #{tpu_custom_call.1} parent=11 // pred_check_branch
          %151 = sbr.rel (%p149) target = $region20
        $region19: #{tpu_custom_call.1} parent=11 // pred_region
          _
        $region20: #{tpu_custom_call.1} parent=11 // pred_fallthru
          _
        // Predicated region
        $region21: #{tpu_custom_call.1} parent=11 // pred_check
          %p152 = pneg %p105
        $region22: #{tpu_custom_call.1} parent=11 // pred_check_branch
          %154 = sbr.rel (%p152) target = $region24
        $region23: #{tpu_custom_call.1} parent=11 // pred_region
          _
        $region24: #{tpu_custom_call.1} parent=11 // pred_fallthru
          _
      $region12: #{tpu_custom_call.1} parent=5 // pred_fallthru
        _
      %p155 = scmp.lt.s32.totalorder %s16, 2
      // Predicated region
      $region25: #{tpu_custom_call.1} parent=5 // pred_check
        %p156 = pneg %p155
      $region26: #{tpu_custom_call.1} parent=5 // pred_check_branch
        %158 = sbr.rel (%p156) target = $region28
      $region27: #{tpu_custom_call.1} parent=5 // pred_region
        // Predicated region
        $region29: #{tpu_custom_call.1} parent=27 // pred_check
          %p159 = pneg %p36
        $region30: #{tpu_custom_call.1} parent=27 // pred_check_branch
          %161 = sbr.rel (%p159) target = $region32
        $region31: #{tpu_custom_call.1} parent=27 // pred_region
          %s162 = sand.u32 %s26, 1
          %s163 = scalar_lea.sflag [#allocation3], %s162
          %s164 = sand.u32 %s26, 1
          %s165 = smul.addr %s164, 64
          %s166 = scalar_lea.vmem [#allocation2], %s165
          %s167 = smul.u32 2, %s16
          %169 = vsyncadd %s163, 0
          %s170 = smul.addr %s167, 4
          %s171 = smul.addr %s170, 8
          %s172 = scalar_lea.hbm %s0, %s171
          %s173 = sshll.u32 %s172, 4
          %s174 = int_to_ptr.hbm [resolvable:$true] %s173
          %s175 = sshll.u32 %s166, 4
          %s176 = int_to_ptr.vmem [resolvable:$true] %s175
          %181 = dma.hbm_to_vmem [thread:$0]  %s174, 1024, %s176, %s163, 128, 128, 8
        $region32: #{tpu_custom_call.1} parent=27 // pred_fallthru
          _
      $region28: #{tpu_custom_call.1} parent=5 // pred_fallthru
        _
      %p182 = scmp.le.s32.totalorder 1, %s16
      %p183 = scmp.lt.s32.totalorder %s16, 3
      %p184 = pnand %p182, %p183
      %p185 = pneg %p184
      // Predicated region
      $region33: #{tpu_custom_call.1} parent=5 // pred_check
        _
      $region34: #{tpu_custom_call.1} parent=5 // pred_check_branch
        %187 = sbr.rel (%p184) target = $region36
      $region35: #{tpu_custom_call.1} parent=5 // pred_region
        %s188 = ssub.s32 %s16, 1
        %s189 = sand.u32 %s29, 1
        %s190 = scalar_lea.sflag [#allocation3], %s189
        %s191 = sand.u32 %s29, 1
        %s192 = smul.addr %s191, 64
        %s193 = scalar_lea.vmem [#allocation2], %s192
        // Predicated region
        $region37: #{tpu_custom_call.1} parent=35 // pred_check
          %p194 = pneg %p42
        $region38: #{tpu_custom_call.1} parent=35 // pred_check_branch
          %196 = sbr.rel (%p194) target = $region40
        $region39: #{tpu_custom_call.1} parent=35 // pred_region
          %198 = dma.done %s190, 1024
        $region40: #{tpu_custom_call.1} parent=35 // pred_fallthru
          _
        %s199 = sand.u32 %s29, 1
        %s200 = scalar_lea.sflag [#allocation3], %s199
        %s201 = sand.u32 %s29, 1
        %s202 = smul.addr %s201, 64
        %s203 = scalar_lea.vmem [#allocation2], %s202
        %p204 = pneg %p42
        %p205 = pneg %p39
        %p206 = pneg %p63
        %p207 = pneg %p60
        %p208 = pneg %p84
        %p209 = pneg %p81
        %p210 = pneg %p105
        %p211 = pneg %p102
        %p212 = pneg %p131
        %p213 = pneg %p128
        %s214 = sand.u32 %s118, 1
        %s215 = scalar_lea.sflag [#allocation4], %s214
        %s216 = sand.u32 %s118, 1
        %s217 = smul.addr %s216, 64
        %s218 = scalar_lea.vmem [#allocation5], %s217
        %s219 = smul.u32 2, %s21
        %s220 = smul.u32 2, %s21
        %v221 = vld [vmem:[%s193] sm:$0xff]
        %v222 = vld [vmem:[%s193 + $0x8] sm:$0xff]
        %v223 = vld [vmem:[%s193 + $0x10] sm:$0xff]
        %v224 = vld [vmem:[%s193 + $0x18] sm:$0xff]
        %v225 = vld [vmem:[%s193 + $0x20] sm:$0xff]
        %v226 = vld [vmem:[%s193 + $0x28] sm:$0xff]
        %v227 = vld [vmem:[%s193 + $0x30] sm:$0xff]
        %v228 = vld [vmem:[%s193 + $0x38] sm:$0xff]
        %v229 = vld [vmem:[%s1] sm:$0xff]
        %v230 = vld [vmem:[%s1 + $0x8] sm:$0xff]
        %v231 = vld [vmem:[%s1 + $0x10] sm:$0xff]
        %v232 = vld [vmem:[%s1 + $0x18] sm:$0xff]
        %v233 = vmul.f32 %v221, %v229
        %v234 = vmul.f32 %v222, %v230
        %v235 = vmul.f32 %v223, %v231
        %v236 = vmul.f32 %v224, %v232
        %v237 = vmul.f32 %v225, %v229
        %v238 = vmul.f32 %v226, %v230
        %v239 = vmul.f32 %v227, %v231
        %v240 = vmul.f32 %v228, %v232
        %241 = vadd.xlane.f32.xlu0 %v233
        %v242 = vpop.xlane.xlu0 %241
        %243 = vadd.xlane.f32.xlu0 %v234
        %v244 = vpop.xlane.xlu0 %243
        %245 = vadd.xlane.f32.xlu0 %v235
        %v246 = vpop.xlane.xlu0 %245
        %247 = vadd.xlane.f32.xlu0 %v236
        %v248 = vpop.xlane.xlu0 %247
        %249 = vadd.xlane.f32.xlu0 %v237
        %v250 = vpop.xlane.xlu0 %249
        %251 = vadd.xlane.f32.xlu0 %v238
        %v252 = vpop.xlane.xlu0 %251
        %253 = vadd.xlane.f32.xlu0 %v239
        %v254 = vpop.xlane.xlu0 %253
        %255 = vadd.xlane.f32.xlu0 %v240
        %v256 = vpop.xlane.xlu0 %255
        %v257 = vld [vmem:[%s2] sm:$0xff]
        %v258 = vld [vmem:[%s2 + $0x8] sm:$0xff]
        %v259 = vld [vmem:[%s2 + $0x10] sm:$0xff]
        %v260 = vld [vmem:[%s2 + $0x18] sm:$0xff]
        %v269 = vlaneseq
        %v270 = vand.u32 %v269, 127
        %v271 = vperm.slane %v242, %v270
        %v272 = vadd.s32 %v270, 4294967288
        %v273 = vperm.slane %v244, %v272
        %vm274 = vcmask 130112
        %v275 = vsel %vm274, %v273, %v271
        %v276 = vadd.s32 %v270, 4294967280
        %v277 = vperm.slane %v246, %v276
        %vm278 = vcmask 195712
        %v279 = vsel %vm278, %v277, %v275
        %v280 = vadd.s32 %v270, 4294967272
        %v281 = vperm.slane %v248, %v280
        %vm282 = vcmask 261312
        %v283 = vsel %vm282, %v281, %v279
        %v284 = vperm.slane %v250, %v270
        %v285 = vperm.slane %v252, %v272
        %v286 = vsel %vm274, %v285, %v284
        %v287 = vperm.slane %v254, %v276
        %v288 = vsel %vm278, %v287, %v286
        %v289 = vperm.slane %v256, %v280
        %v290 = vsel %vm282, %v289, %v288
        %vm291 = vcmask 1041409
        %v292 = vsel %vm291, %v290, %v283
        %vm293 = vcmask 261120
        %v294 = vsel %vm293, %v292, 0
        %296 = vmatpush.msra.mxu0 0.0
        %297 = vmatpush.msra.mxu0 0.0
        %298 = vmatpush.msra.mxu0 0.0
        %299 = vmatpush.msra.mxu0 0.0
        %300 = vmatpush.msra.mxu0 0.0
        %301 = vmatpush.msra.mxu0 0.0
        %302 = vmatpush.msra.mxu0 0.0
        %303 = vmatpush.msra.mxu0 0.0
        %304 = vmatpush.msra.mxu0 0.0
        %305 = vmatpush.msra.mxu0 0.0
        %306 = vmatpush.msra.mxu0 0.0
        %307 = vmatpush.msra.mxu0 0.0
        %308 = vmatpush.msra.mxu0 %v260
        %309 = vmatpush.msra.mxu0 %v259
        %310 = vmatpush.msra.mxu0 %v258
        %311 = vmatpush.msra.mxu0 %v257
        %312 = vmatmul.f32.gmra.mxu0 %v294
        %v313 = vpop.f32.mrf.mxu0
        %v314 = vadd.f32 0.0, %v313
        %315 = vdwg.mxu0
        %v316 = vmax.f32 %v314, 0.0
        %v317 = vld [vmem:[%s3] sm:$0x3]
        %vm318 = vcmask 15360
        %v320 = vsel %vm318, %v316, 0
        %vm322 = vcmask 1041408
        %v324 = vsel %vm322, %v317, 0
        %326 = vmatpush.msra.mxu0 0.0
        %327 = vmatpush.msra.mxu0 0.0
        %328 = vmatpush.msra.mxu0 0.0
        %329 = vmatpush.msra.mxu0 0.0
        %330 = vmatpush.msra.mxu0 0.0
        %331 = vmatpush.msra.mxu0 0.0
        %332 = vmatpush.msra.mxu0 0.0
        %333 = vmatpush.msra.mxu0 0.0
        %334 = vmatpush.msra.mxu0 0.0
        %335 = vmatpush.msra.mxu0 0.0
        %336 = vmatpush.msra.mxu0 0.0
        %337 = vmatpush.msra.mxu0 0.0
        %338 = vmatpush.msra.mxu0 0.0
        %339 = vmatpush.msra.mxu0 0.0
        %340 = vmatpush.msra.mxu0 0.0
        %341 = vmatpush.msra.mxu0 %v324
        %342 = vmatmul.f32.gmra.mxu0 %v320
        %v343 = vpop.f32.mrf.mxu0
        %v344 = vadd.f32 0.0, %v343
        %345 = vdwg.mxu0
        %v346 = vxor.u32 %v344, 2147483648
        %v347 = vmul.f32 %v346, 1.442695
        %v348 = vpow.pop %v347
        %v349 = vadd.f32 %v348, 1.0
        %v350 = vrcp.pop %v349
        %v351 = vmul.f32 %v349, %v350
        %v352 = vsub.f32 1.0, %v351
        %v353 = vmul.f32 %v350, %v352
        %v354 = vadd.f32 %v350, %v353
        %vm355 = vweird.f32 %v349
        %vm356 = vweird.f32 %v350
        %vm357 = vmor %vm355, %vm356
        %v358 = vsel %vm357, %v350, %v354
        %v359 = vand.u32 2147483647, %v349
        %vm360 = vcmp.eq.f32.partialorder %v359, 8.507059e+37
        %v361 = vand.u32 %v349, 2147483648
        %v362 = vor.u32 1.1754944e-38, %v361
        %v363 = vsel %vm360, %v362, %v358
        %v364 = vmul.f32 1.0, %v363
        %v365 = vperm.slane %v364, 0
        %v366 = vlaneseq
        %v367 = vshrl.u32 %v366, 7
        %369 = vset.pattern.permute.xlu0 %v367
        %370 = vperm.xlu0 %369, %v365
        %v371 = vpop.permute.xlu0 %370
        %v372 = vlaneseq
        %v373 = vshrl.u32 %v372, 7
        %v374 = vadd.s32 %v373, 8
        %375 = vset.pattern.permute.xlu0 %v374
        %376 = vperm.xlu0 %375, %v365
        %v377 = vpop.permute.xlu0 %376
        %v378 = vlaneseq
        %v379 = vshrl.u32 %v378, 7
        %v380 = vadd.s32 %v379, 16
        %381 = vset.pattern.permute.xlu0 %v380
        %382 = vperm.xlu0 %381, %v365
        %v383 = vpop.permute.xlu0 %382
        %v384 = vlaneseq
        %v385 = vshrl.u32 %v384, 7
        %v386 = vadd.s32 %v385, 24
        %387 = vset.pattern.permute.xlu0 %v386
        %388 = vperm.xlu0 %387, %v365
        %v389 = vpop.permute.xlu0 %388
        %v390 = vperm.slane %v364, 1
        %v391 = vlaneseq
        %v392 = vshrl.u32 %v391, 7
        %394 = vset.pattern.permute.xlu0 %v392
        %395 = vperm.xlu0 %394, %v390
        %v396 = vpop.permute.xlu0 %395
        %v397 = vlaneseq
        %v398 = vshrl.u32 %v397, 7
        %v399 = vadd.s32 %v398, 8
        %400 = vset.pattern.permute.xlu0 %v399
        %401 = vperm.xlu0 %400, %v390
        %v402 = vpop.permute.xlu0 %401
        %v403 = vlaneseq
        %v404 = vshrl.u32 %v403, 7
        %v405 = vadd.s32 %v404, 16
        %406 = vset.pattern.permute.xlu0 %v405
        %407 = vperm.xlu0 %406, %v390
        %v408 = vpop.permute.xlu0 %407
        %v409 = vlaneseq
        %v410 = vshrl.u32 %v409, 7
        %v411 = vadd.s32 %v410, 24
        %412 = vset.pattern.permute.xlu0 %v411
        %413 = vperm.xlu0 %412, %v390
        %v414 = vpop.permute.xlu0 %413
        %v415 = vmul.f32 %v221, %v371
        %v416 = vmul.f32 %v222, %v377
        %v417 = vmul.f32 %v223, %v383
        %v418 = vmul.f32 %v224, %v389
        %v419 = vmul.f32 %v225, %v396
        %v420 = vmul.f32 %v226, %v402
        %v421 = vmul.f32 %v227, %v408
        %v422 = vmul.f32 %v228, %v414
        %423 = vst [vmem:[%s218] sm:$0xff] %v415
        %424 = vst [vmem:[%s218 + $0x8] sm:$0xff] %v416
        %425 = vst [vmem:[%s218 + $0x10] sm:$0xff] %v417
        %426 = vst [vmem:[%s218 + $0x18] sm:$0xff] %v418
        %427 = vst [vmem:[%s218 + $0x20] sm:$0xff] %v419
        %428 = vst [vmem:[%s218 + $0x28] sm:$0xff] %v420
        %429 = vst [vmem:[%s218 + $0x30] sm:$0xff] %v421
        %430 = vst [vmem:[%s218 + $0x38] sm:$0xff] %v422
        %s431 = sand.u32 %s118, 1
        %s432 = scalar_lea.sflag [#allocation4], %s431
        %s433 = sand.u32 %s118, 1
        %s434 = smul.addr %s433, 64
        %s435 = scalar_lea.vmem [#allocation5], %s434
        // Predicated region
        $region41: #{tpu_custom_call.1} parent=35 // pred_check
          %p436 = pneg %p128
        $region42: #{tpu_custom_call.1} parent=35 // pred_check_branch
          %438 = sbr.rel (%p436) target = $region44
        $region43: #{tpu_custom_call.1} parent=35 // pred_region
          %s439 = smul.u32 2, %s21
          %441 = vsyncadd %s432, 0
          %s442 = smul.addr %s439, 4
          %s443 = smul.addr %s442, 8
          %s444 = scalar_lea.hbm %s4, %s443
          %s445 = sshll.u32 %s435, 4
          %s446 = int_to_ptr.vmem [resolvable:$true] %s445
          %s447 = sshll.u32 %s444, 4
          %s448 = int_to_ptr.hbm [resolvable:$true] %s447
          %453 = dma.vmem_to_hbm [thread:$0]  %s446, 1024, %s448, %s432, 128, 128, 8
        $region44: #{tpu_custom_call.1} parent=35 // pred_fallthru
          _
      $region36: #{tpu_custom_call.1} parent=5 // pred_fallthru
        _
      %p454 = scmp.le.s32.totalorder 2, %s16
      // Predicated region
      $region45: #{tpu_custom_call.1} parent=5 // pred_check
        %p455 = pneg %p454
      $region46: #{tpu_custom_call.1} parent=5 // pred_check_branch
        %457 = sbr.rel (%p455) target = $region48
      $region47: #{tpu_custom_call.1} parent=5 // pred_region
        %s458 = ssub.s32 %s16, 2
        // Predicated region
        $region49: #{tpu_custom_call.1} parent=47 // pred_check
          %p459 = pneg %p134
        $region50: #{tpu_custom_call.1} parent=47 // pred_check_branch
          %461 = sbr.rel (%p459) target = $region52
        $region51: #{tpu_custom_call.1} parent=47 // pred_region
          %s462 = sand.u32 %s119, 1
          %s463 = scalar_lea.sflag [#allocation4], %s462
          %s464 = sand.u32 %s119, 1
          %s465 = smul.addr %s464, 64
          %s466 = scalar_lea.vmem [#allocation5], %s465
          %468 = dma.done %s463, 1024
        $region52: #{tpu_custom_call.1} parent=47 // pred_fallthru
          _
      $region48: #{tpu_custom_call.1} parent=5 // pred_fallthru
        _
    $region6: #{tpu_custom_call.1} parent=1 // loop_footer
      %s20 = sadd.s32 1, %s16
    $region7: #{tpu_custom_call.1} parent=1 // loop_footer_branch
      %15 = sbr.rel target = $region3
    $region8: #{tpu_custom_call.1} parent=1 // loop_exit
      _
    %469 = vsyncpa [#allocation3], 1
    %s470 = scalar_lea.sflag [#allocation3], 1
    %471 = vsyncpa %s470, 1
    %472 = vsyncpa [#allocation4], 1
    %s473 = scalar_lea.sflag [#allocation4], 1
    %474 = vsyncpa %s473, 1

</llo_original>
